<compile_context>
chip_gen: v7x
topology: tpu7x:2x2x1
jax: 0.10.0
libtpu: 0.0.40
codegen_flags: <defaults>
</compile_context>

<pallas_src>
import functools

import jax
import jax.numpy as jnp
from jax.experimental import pallas as pl
from jax.experimental.pallas import tpu as pltpu

LANES = 128
ACC_SUBLANES = 8  # f32 accumulator vreg sublane count


def _sublane_granularity(dtype) -> int:
    # Minimum second-minor tile multiple for the input dtype's packed layout.
    return {4: 8, 2: 16, 1: 32}.get(jnp.dtype(dtype).itemsize, 8)


def _device_tiling():
    """(row_tile, num_splits, vmem_limit_bytes) defaults per TPU generation."""
    try:
        kind = jax.devices()[0].device_kind.lower()
    except Exception:  # defensive: never fail tiling selection
        kind = ""
    if "v7" in kind:
        # 2 TCs, ~3.2 TB/s HBM per TC, 64 MiB physical VMEM (32 MiB scoped
        # default): largest tiles + explicit VMEM ceiling + 2-way TC split.
        return 8192, 2, 40 * 1024 * 1024
    if "v6" in kind:
        # Single TC, 128 MiB VMEM (32 MiB scoped default).
        return 4096, 1, None
    # v5e (16 MiB scoped default, ~820 GB/s HBM) and anything unrecognized:
    # 1 MiB/buffer tiles are already ~85% of the streaming roofline and safe.
    return 2048, 1, None


def _rmse_reduce_kernel(x_ref, y_ref, o_ref, *, tm, tiles_per_split, valid_rows):
    # Grid = (split, row_tiles).  The o_ref block (1, 8, 128) keeps the same
    # block index across the trailing "arbitrary" axis, so it stays
    # VMEM-resident and acts as a vreg-shaped accumulator for this split.
    s = pl.program_id(0)
    i = pl.program_id(1)

    @pl.when(i == 0)
    def _():
        o_ref[...] = jnp.zeros_like(o_ref)

    x = x_ref[...].astype(jnp.float32)
    y = y_ref[...].astype(jnp.float32)
    d = jnp.abs(x - y)  # == sqrt((x - y)^2); single VPU op, no EUP/sqrt.

    # Mask rows beyond the true data extent.  Covers (a) the partial last tile
    # (OOB region of a boundary block is unspecified data) and (b) clamped
    # duplicate tiles of the last split when tiles_total % nsplit != 0.
    # valid_rows / tm / tiles_per_split are static Python ints (closure).
    row_start = (s * tiles_per_split + i) * tm
    row_ids = jax.lax.broadcasted_iota(jnp.int32, (tm, LANES), 0) + row_start
    d = jnp.where(row_ids < valid_rows, d, 0.0)

    # Partial-sum within the tile: fold the (tm//8) sublane groups together.
    # Pure VPU vreg adds, no cross-lane XLU traffic; fully hidden under DMA.
    partial = jnp.sum(d.reshape(tm // ACC_SUBLANES, ACC_SUBLANES, LANES), axis=0)
    o_ref[...] += partial[None, :, :]


def rmse_loss(inputs, targets, *, reduce=True, row_tile=None, num_splits=None):
    """Pallas implementation of RMSELoss.forward.

    reduce=True  -> scalar f32  mean(sqrt((inputs - targets)^2))
    reduce=False -> elementwise sqrt((inputs - targets)^2)
    """
    assert inputs.shape == targets.shape
    total_n = inputs.size

    if not reduce:
        # TODO(synk): unreduced path kept in plain JAX (trivial elementwise op,
        # no reduction hot path worth a custom kernel).
        d = inputs - targets
        return jnp.sqrt(d * d)

    # ---- static, device-aware tiling decisions (all Python ints) ----
    dflt_tile, dflt_splits, vmem_limit = _device_tiling()
    if row_tile is None:
        row_tile = dflt_tile
    if num_splits is None:
        num_splits = dflt_splits

    sub = _sublane_granularity(inputs.dtype)
    row_tile = max(sub, (row_tile // sub) * sub)

    rows = -(-total_n // LANES)  # true data rows in the lane-dense view
    if rows < sub:
        # Tiny tensor: pad up to one minimum tile (< 32*128 elements).
        rows_arr, tm = sub, sub
    else:
        # Round tm DOWN to the sublane multiple so blocks never exceed the
        # array; the partial last tile is handled by the in-kernel mask.
        rows_arr = rows
        tm = min(row_tile, (rows // sub) * sub)

    tiles_total = -(-rows_arr // tm)
    nsplit = max(1, min(num_splits, tiles_total))
    tiles_per_split = -(-tiles_total // nsplit)

    # ---- lane-dense (rows_arr, 128) view; pad only the tiny tail ----
    # TODO(synk): the <128-element / <32-row zero pad still materializes a copy
    # in XLA; a manual-DMA (memory_space=pl.ANY) variant could avoid even that.
    x_flat = inputs.reshape(-1)
    y_flat = targets.reshape(-1)
    pad_amt = rows_arr * LANES - total_n
    if pad_amt:
        x_flat = jnp.pad(x_flat, (0, pad_amt))
        y_flat = jnp.pad(y_flat, (0, pad_amt))
    x2d = x_flat.reshape(rows_arr, LANES)
    y2d = y_flat.reshape(rows_arr, LANES)

    def in_map(s, i):
        # Clamp so the last split never indexes a fully out-of-range block;
        # any clamped duplicate is zeroed by the in-kernel row mask.
        return (jnp.minimum(s * tiles_per_split + i, tiles_total - 1), 0)

    kernel = functools.partial(
        _rmse_reduce_kernel,
        tm=tm,
        tiles_per_split=tiles_per_split,
        valid_rows=rows,
    )

    processed = nsplit * tiles_per_split * tm * LANES
    itemsize = jnp.dtype(inputs.dtype).itemsize
    cost = pl.CostEstimate(
        flops=3 * processed,  # sub + abs + accumulate
        transcendentals=0,
        bytes_accessed=2 * processed * itemsize
        + nsplit * ACC_SUBLANES * LANES * 4,
    )

    cp_kwargs = dict(dimension_semantics=("parallel", "arbitrary"))
    if vmem_limit is not None:
        cp_kwargs["vmem_limit_bytes"] = vmem_limit

    partials = pl.pallas_call(
        kernel,
        out_shape=jax.ShapeDtypeStruct((nsplit, ACC_SUBLANES, LANES), jnp.float32),
        grid_spec=pltpu.PrefetchScalarGridSpec(
            num_scalar_prefetch=0,
            grid=(nsplit, tiles_per_split),
            in_specs=[
                pl.BlockSpec((tm, LANES), in_map),
                pl.BlockSpec((tm, LANES), in_map),
            ],
            out_specs=pl.BlockSpec(
                (1, ACC_SUBLANES, LANES), lambda s, i: (s, 0, 0)
            ),
        ),
        compiler_params=pltpu.CompilerParams(**cp_kwargs),
        cost_estimate=cost,
    )(x2d, y2d)

    # Single final cross-lane reduce on a tiny (nsplit, 8, 128) array in XLA.
    return jnp.sum(partials) / jnp.float32(total_n)


if __name__ == "__main__":
    key = jax.random.PRNGKey(0)
    k1, k2, k3, k4, k5, k6, k7, k8 = jax.random.split(key, 8)

    # 1) Small NCHW shape: batch=2, channels=4, spatial=16x16 (lane-aligned).
    x = jax.random.normal(k1, (2, 4, 16, 16), dtype=jnp.float32)
    t = jax.random.normal(k2, (2, 4, 16, 16), dtype=jnp.float32)
    loss = jax.block_until_ready(rmse_loss(x, t, reduce=True))
    ref = jnp.mean(jnp.sqrt((x - t) ** 2))
    assert jnp.allclose(loss, ref, atol=1e-5, rtol=1e-5), (loss, ref)

    # 2) Awkward tiny shape (not a multiple of 128): tiny-pad path.
    x2 = jax.random.normal(k3, (2, 3, 7, 5), dtype=jnp.float32)
    t2 = jax.random.normal(k4, (2, 3, 7, 5), dtype=jnp.float32)
    loss2 = jax.block_until_ready(rmse_loss(x2, t2, reduce=True))
    ref2 = jnp.mean(jnp.sqrt((x2 - t2) ** 2))
    assert jnp.allclose(loss2, ref2, atol=1e-5, rtol=1e-5), (loss2, ref2)

    # 3) Multi-tile with a masked partial last tile + lane-tail pad.
    x3 = jax.random.normal(k5, (5, 7, 129), dtype=jnp.float32)
    t3 = jax.random.normal(k6, (5, 7, 129), dtype=jnp.float32)
    loss3 = jax.block_until_ready(rmse_loss(x3, t3, reduce=True))
    ref3 = jnp.mean(jnp.sqrt((x3 - t3) ** 2))
    assert jnp.allclose(loss3, ref3, atol=1e-5, rtol=1e-5), (loss3, ref3)

    # 4) bf16 inputs stream in native dtype (16-sublane granularity),
    #    accumulated in f32 in-kernel.
    x4 = jax.random.normal(k7, (2, 8, 64, 64), dtype=jnp.float32).astype(jnp.bfloat16)
    t4 = jax.random.normal(k8, (2, 8, 64, 64), dtype=jnp.float32).astype(jnp.bfloat16)
    loss4 = jax.block_until_ready(rmse_loss(x4, t4, reduce=True))
    ref4 = jnp.mean(jnp.abs(x4.astype(jnp.float32) - t4.astype(jnp.float32)))
    assert jnp.allclose(loss4, ref4, atol=1e-3, rtol=1e-2), (loss4, ref4)

    print("KERNEL_OK")
</pallas_src>

<mosaic_0001>
module attributes {stable_mosaic.version = 11 : i64} {
  func.func @_rmse_reduce_kernel(%arg0: i32, %arg1: i32, %arg2: memref<16x128xf32, #tpu.memory_space<vmem>>, %arg3: memref<16x128xf32, #tpu.memory_space<vmem>>, %arg4: memref<1x8x128xf32, #tpu.memory_space<vmem>>) attributes {dimension_semantics = [#tpu.dimension_semantics<parallel>, #tpu.dimension_semantics<arbitrary>], iteration_bounds = array<i64: 1, 1>, scalar_prefetch = 0 : i64, scratch_operands = 0 : i64, tpu.core_type = #tpu.core_type<tc>, window_params = [{transform_indices = @transform_0, window_bounds = array<i64: 16, 128>}, {transform_indices = @transform_1, window_bounds = array<i64: 16, 128>}, {transform_indices = @transform_2, window_bounds = array<i64: 1, 8, 128>}]} {
    %c0_i32 = arith.constant 0 : i32
    %0 = arith.cmpi eq, %arg1, %c0_i32 : i32
    %1 = arith.extui %0 : i1 to i32
    %c0_i32_0 = arith.constant 0 : i32
    %2 = arith.cmpi ne, %1, %c0_i32_0 : i32
    scf.if %2 {
      %cst_12 = arith.constant 0.000000e+00 : f32
      %23 = vector.broadcast %cst_12 : f32 to vector<1x8x128xf32>
      %c0_13 = arith.constant 0 : index
      %c0_14 = arith.constant 0 : index
      %c0_15 = arith.constant 0 : index
      %24 = vector.load %arg4[%c0_13, %c0_14, %c0_15] : memref<1x8x128xf32, #tpu.memory_space<vmem>>, vector<1x8x128xf32>
      tpu.vector_store %arg4[%c0_13, %c0_14, %c0_15], %23 {strides = array<i32>} : memref<1x8x128xf32, #tpu.memory_space<vmem>>, vector<1x8x128xf32>,
    } else {
    }
    %c0 = arith.constant 0 : index
    %c0_1 = arith.constant 0 : index
    %3 = vector.load %arg2[%c0, %c0_1] : memref<16x128xf32, #tpu.memory_space<vmem>>, vector<16x128xf32>
    %c0_2 = arith.constant 0 : index
    %c0_3 = arith.constant 0 : index
    %4 = vector.load %arg3[%c0_2, %c0_3] : memref<16x128xf32, #tpu.memory_space<vmem>>, vector<16x128xf32>
    %5 = arith.subf %3, %4 : vector<16x128xf32>
    %6 = math.absf %5 : vector<16x128xf32>
    %c1_i32 = arith.constant 1 : i32
    %7 = arith.muli %arg0, %c1_i32 : i32
    %8 = arith.addi %7, %arg1 : i32
    %c16_i32 = arith.constant 16 : i32
    %9 = arith.muli %8, %c16_i32 : i32
    %10 = tpu.iota {dimensions = array<i32: 0>} : vector<16x128xi32>
    %11 = vector.broadcast %9 : i32 to vector<16x128xi32>
    %12 = arith.addi %10, %11 : vector<16x128xi32>
    %c16_i32_4 = arith.constant 16 : i32
    %13 = vector.broadcast %c16_i32_4 : i32 to vector<16x128xi32>
    %14 = arith.cmpi slt, %12, %13 : vector<16x128xi32>
    %cst = arith.constant 0.000000e+00 : f32
    %15 = vector.broadcast %cst : f32 to vector<16x128xf32>
    %16 = arith.select %14, %6, %15 : vector<16x128xi1>, vector<16x128xf32>
    %17 = vector.shape_cast %16 : vector<16x128xf32> to vector<2x8x128xf32>
    %cst_5 = arith.constant dense<0.000000e+00> : vector<8x128xf32>
    %18 = vector.multi_reduction <add>, %17, %cst_5 [0] : vector<2x8x128xf32> to vector<8x128xf32>
    %c0_6 = arith.constant 0 : index
    %c0_7 = arith.constant 0 : index
    %c0_8 = arith.constant 0 : index
    %19 = vector.load %arg4[%c0_6, %c0_7, %c0_8] : memref<1x8x128xf32, #tpu.memory_space<vmem>>, vector<1x8x128xf32>
    %20 = vector.shape_cast %18 : vector<8x128xf32> to vector<1x8x128xf32>
    %21 = arith.addf %19, %20 : vector<1x8x128xf32>
    %c0_9 = arith.constant 0 : index
    %c0_10 = arith.constant 0 : index
    %c0_11 = arith.constant 0 : index
    %22 = vector.load %arg4[%c0_9, %c0_10, %c0_11] : memref<1x8x128xf32, #tpu.memory_space<vmem>>, vector<1x8x128xf32>
    tpu.vector_store %arg4[%c0_9, %c0_10, %c0_11], %21 {strides = array<i32>} : memref<1x8x128xf32, #tpu.memory_space<vmem>>, vector<1x8x128xf32>,
    return
  }
  func.func @transform_0(%arg0: i32, %arg1: i32) -> (i32, i32) {
    %c1_i32 = arith.constant 1 : i32
    %0 = arith.muli %arg0, %c1_i32 : i32
    %1 = arith.addi %0, %arg1 : i32
    %c0_i32 = arith.constant 0 : i32
    %2 = arith.minsi %1, %c0_i32 : i32
    %c0_i32_0 = arith.constant 0 : i32
    %c0_i32_1 = arith.constant 0 : i32
    return %2, %c0_i32_0 : i32, i32
  }
  func.func @transform_1(%arg0: i32, %arg1: i32) -> (i32, i32) {
    %c1_i32 = arith.constant 1 : i32
    %0 = arith.muli %arg0, %c1_i32 : i32
    %1 = arith.addi %0, %arg1 : i32
    %c0_i32 = arith.constant 0 : i32
    %2 = arith.minsi %1, %c0_i32 : i32
    %c0_i32_0 = arith.constant 0 : i32
    %c0_i32_1 = arith.constant 0 : i32
    return %2, %c0_i32_0 : i32, i32
  }
  func.func @transform_2(%arg0: i32, %arg1: i32) -> (i32, i32, i32) {
    %c0_i32 = arith.constant 0 : i32
    %c0_i32_0 = arith.constant 0 : i32
    %c0_i32_1 = arith.constant 0 : i32
    return %arg0, %c0_i32, %c0_i32_0 : i32, i32, i32
  }
}

</mosaic_0001>

<llo_original>
// kernel: tpu_custom_call.1
$region0: #{tpu_custom_call.1}
  #allocation0 [shape = 'u32[]', space=smem, size = 0x4, offset = 0x4, fixed_abs, tag = 'smem constant byte address 0x4 - core index']
  #allocation1 [shape = 'u32[144,128]{1,0:T(1,128)}', space=vmem, size = 0x12000, scoped, tag = 'internal scratch']
  %s0 = inlined_call_operand.hbm [shape: f32[16,128], index: 0, kind: input, shape index: {}]
  %s1 = inlined_call_operand.hbm [shape: f32[16,128], index: 1, kind: input, shape index: {}]
  %s2 = inlined_call_operand.hbm [shape: f32[1,8,128], index: 2, kind: output, shape index: {}]
  %s3 = sld [smem:[#allocation0]]
  $region30: #{tpu_custom_call.1} parent=0
    _
  %s5 = ssub.s32 1, %s3
  %s6 = scalar_select 0, %s5, %s3
  $region1: #{tpu_custom_call.1} parent=0
    #allocation2 [shape = 'u8[8192]{0}', space=vmem, size = 0x2000, scoped, tag = 'input window, operand 0, single buffered']
    #allocation3 [shape = 's32[1]{0}', space=sflag, size = 0x4, scoped, tag = 'scoped memory for tpu_custom_call.1']
    #allocation4 [shape = 's32[1]{0}', space=sflag, size = 0x4, scoped, tag = 'scoped memory for tpu_custom_call.1']
    #allocation5 [shape = 'u8[8192]{0}', space=vmem, size = 0x2000, scoped, tag = 'input window, operand 1, single buffered']
    #allocation6 [shape = 's32[1]{0}', space=sflag, size = 0x4, scoped, tag = 'scoped memory for tpu_custom_call.1']
    #allocation7 [shape = 'u8[4096]{0}', space=vmem, size = 0x1000, scoped, tag = 'output window, operand 0, single buffered']
    %7 = vsyncpa [#allocation3], 0
    %8 = vsyncpa [#allocation6], 0
    %9 = vsyncpa [#allocation4], 0
    // Predicated region
    $region2: #{tpu_custom_call.1} parent=1 // pred_check
      _
    $region3: #{tpu_custom_call.1} parent=1 // pred_check_branch
      %11 = sbr.rel (0) target = $region5
    $region4: #{tpu_custom_call.1} parent=1 // pred_region
      %s12 = sadd.s32 0, 0
      %p13 = scmp.lt.s32.totalorder %s12, 0
      %s14 = scalar_select %p13, %s12, 0
      %s15 = smul.u32 2, %s14
      %s17 = ssub.s32 256, 256
      %18 = vsyncadd [#allocation3], %s17
      %s19 = smul.addr %s15, 128
      %s20 = scalar_lea.hbm %s0, %s19
      %s21 = sshll.u32 [#allocation2], 4
      %s22 = int_to_ptr.vmem [resolvable:$true] %s21
      %27 = dma.hbm_to_vmem [thread:$0]  %s20, 256, %s22, [#allocation3], 128, 128, 8
    $region5: #{tpu_custom_call.1} parent=1 // pred_fallthru
      _
    // Predicated region
    $region6: #{tpu_custom_call.1} parent=1 // pred_check
      _
    $region7: #{tpu_custom_call.1} parent=1 // pred_check_branch
      %29 = sbr.rel (0) target = $region9
    $region8: #{tpu_custom_call.1} parent=1 // pred_region
      %s30 = sadd.s32 0, 0
      %p31 = scmp.lt.s32.totalorder %s30, 0
      %s32 = scalar_select %p31, %s30, 0
      %s33 = smul.u32 2, %s32
      %s35 = ssub.s32 256, 256
      %36 = vsyncadd [#allocation6], %s35
      %s37 = smul.addr %s33, 128
      %s38 = scalar_lea.hbm %s1, %s37
      %s39 = sshll.u32 [#allocation5], 4
      %s40 = int_to_ptr.vmem [resolvable:$true] %s39
      %45 = dma.hbm_to_vmem [thread:$0]  %s38, 256, %s40, [#allocation6], 128, 128, 8
    $region9: #{tpu_custom_call.1} parent=1 // pred_fallthru
      _
    // Predicated region
    $region10: #{tpu_custom_call.1} parent=1 // pred_check
      _
    $region11: #{tpu_custom_call.1} parent=1 // pred_check_branch
      %47 = sbr.rel (0) target = $region13
    $region12: #{tpu_custom_call.1} parent=1 // pred_region
      %48 = dma.done [#allocation3], 256
    $region13: #{tpu_custom_call.1} parent=1 // pred_fallthru
      _
    // Predicated region
    $region14: #{tpu_custom_call.1} parent=1 // pred_check
      _
    $region15: #{tpu_custom_call.1} parent=1 // pred_check_branch
      %50 = sbr.rel (0) target = $region17
    $region16: #{tpu_custom_call.1} parent=1 // pred_region
      %51 = dma.done [#allocation6], 256
    $region17: #{tpu_custom_call.1} parent=1 // pred_fallthru
      _
    %s52 = sadd.s32 0, 0
    %p53 = scmp.lt.s32.totalorder %s52, 0
    %s54 = scalar_select %p53, %s52, 0
    %s55 = smul.u32 2, %s54
    %s56 = sadd.s32 0, 0
    %p57 = scmp.lt.s32.totalorder %s56, 0
    %s58 = scalar_select %p57, %s56, 0
    %s59 = smul.u32 2, %s58
    %p60 = scmp.eq.s32.totalorder 0, 0
    // Predicated region
    $region18: #{tpu_custom_call.1} parent=1 // pred_check
      %p61 = pneg %p60
    $region19: #{tpu_custom_call.1} parent=1 // pred_check_branch
      %63 = sbr.rel (%p61) target = $region21
    $region20: #{tpu_custom_call.1} parent=1 // pred_region
      %64 = vst [vmem:[#allocation7] sm:$0xff] 0.0
    $region21: #{tpu_custom_call.1} parent=1 // pred_fallthru
      _
    %v65 = vld [vmem:[#allocation2] sm:$0xff]
    %v66 = vld [vmem:[#allocation2 + $0x8] sm:$0xff]
    %v67 = vld [vmem:[#allocation5] sm:$0xff]
    %v68 = vld [vmem:[#allocation5 + $0x8] sm:$0xff]
    %v69 = vsub.f32 %v65, %v67
    %v70 = vsub.f32 %v66, %v68
    %v71 = vand.u32 2147483647, %v69
    %v72 = vand.u32 2147483647, %v70
    %s73 = sadd.s32 0, 0
    %s74 = smul.u32 %s73, 16
    %v75 = vlaneseq
    %v76 = vshrl.u32 %v75, 7
    %v77 = vadd.s32 %v76, 8
    %v78 = vstv %s74
    %v79 = vadd.s32 %v76, %v78
    %v80 = vadd.s32 %v77, %v78
    %vm81 = vcmp.lt.s32.totalorder %v79, 16
    %vm82 = vcmp.lt.s32.totalorder %v80, 16
    %v83 = vsel %vm81, %v71, 0.0
    %v84 = vsel %vm82, %v72, 0.0
    %v85 = vadd.f32 %v83, %v84
    %v86 = vld [vmem:[#allocation7] sm:$0xff]
    %v87 = vadd.f32 %v86, %v85
    %88 = vst [vmem:[#allocation7] sm:$0xff] %v87
    // Predicated region
    $region22: #{tpu_custom_call.1} parent=1 // pred_check
      _
    $region23: #{tpu_custom_call.1} parent=1 // pred_check_branch
      %90 = sbr.rel (0) target = $region25
    $region24: #{tpu_custom_call.1} parent=1 // pred_region
      %s92 = ssub.s32 128, 128
      %93 = vsyncadd [#allocation4], %s92
      %s95 = sshll.u32 [#allocation7], 4
      %s96 = int_to_ptr.vmem [resolvable:$true] %s95
      %98 = dma.vmem_to_hbm [thread:$0]  %s96, 128, %s2, [#allocation4]
    $region25: #{tpu_custom_call.1} parent=1 // pred_fallthru
      _
    // Predicated region
    $region26: #{tpu_custom_call.1} parent=1 // pred_check
      _
    $region27: #{tpu_custom_call.1} parent=1 // pred_check_branch
      %100 = sbr.rel (0) target = $region29
    $region28: #{tpu_custom_call.1} parent=1 // pred_region
      %101 = dma.done [#allocation4], 128
    $region29: #{tpu_custom_call.1} parent=1 // pred_fallthru
      _
    %102 = vsyncpa [#allocation3], 1
    %103 = vsyncpa [#allocation6], 1
    %104 = vsyncpa [#allocation4], 1

</llo_original>
